<compile_context>
chip_gen: v7x
topology: tpu7x:2x2x1
jax: 0.10.0
libtpu: 0.0.40
codegen_flags: <defaults>
</compile_context>

<pallas_src>
import functools

import jax
import jax.numpy as jnp
from jax.experimental import pallas as pl
from jax.experimental.pallas import tpu as pltpu

MARGIN = 2.5
EPS = 1e-6  # torch.nn.functional.pairwise_distance default: eps added to the difference


def _contrastive_loss_kernel(o1_ref, o2_ref, label_ref, out_ref, *,
                             valid_b, tile_b, margin, eps):
    # Cast in-kernel: HBM copies remain in the caller's dtype (bf16 halves bytes moved).
    o1 = o1_ref[...].astype(jnp.float32)          # (TB, D)
    o2 = o2_ref[...].astype(jnp.float32)          # (TB, D)
    label = label_ref[...]                        # (TB, 1) f32

    diff = o1 - o2 + eps                          # eps on the difference, as in torch
    d2 = jnp.sum(diff * diff, axis=-1, keepdims=True)   # (TB, 1) squared distance
    d = jnp.sqrt(d2)                                     # needed only for the margin branch
    hinge = jnp.maximum(margin - d, 0.0)
    per_ex = (1.0 - label) * d2 + label * (hinge * hinge)  # (TB, 1)

    # Mask rows that only exist because the batch was padded to a tile multiple.
    row = jax.lax.broadcasted_iota(jnp.int32, per_ex.shape, 0)
    global_row = pl.program_id(0) * tile_b + row
    per_ex = jnp.where(global_row < valid_b, per_ex, 0.0)

    tile_sum = jnp.sum(per_ex)

    # Lane-dense (8, 128) partial-sum block: value at [0, 0], zeros elsewhere
    # (unmasked full-vreg store; wrapper sums everything, so zeros are harmless).
    sub = jax.lax.broadcasted_iota(jnp.int32, (8, 128), 0)
    lane = jax.lax.broadcasted_iota(jnp.int32, (8, 128), 1)
    out_ref[...] = jnp.where((sub == 0) & (lane == 0), tile_sum, 0.0)


def _choose_tile_b(batch, feat, itemsize):
    """Pick a batch tile targeting ~2 MiB per input block (safe on v7x VMEM)."""
    target_block_bytes = 2 * 1024 * 1024
    tb = target_block_bytes // max(feat * itemsize, 1)
    tb = max(8, (tb // 8) * 8)                    # multiple of 8 sublanes
    b_pad8 = ((batch + 7) // 8) * 8
    return min(tb, b_pad8)


def contrastive_loss(output1, output2, label, margin=MARGIN):
    """output1, output2: (B, D) float32/bfloat16; label: (B,) or (B, 1). Scalar loss."""
    B, D = output1.shape
    itemsize = jnp.dtype(output1.dtype).itemsize
    tb = _choose_tile_b(B, D, itemsize)
    b_pad = ((B + tb - 1) // tb) * tb
    num_tiles = b_pad // tb

    label2d = jnp.reshape(label, (B, 1)).astype(jnp.float32)
    if b_pad != B:
        output1 = jnp.pad(output1, ((0, b_pad - B), (0, 0)))
        output2 = jnp.pad(output2, ((0, b_pad - B), (0, 0)))
        label2d = jnp.pad(label2d, ((0, b_pad - B), (0, 0)))

    kernel = functools.partial(
        _contrastive_loss_kernel, valid_b=B, tile_b=tb, margin=margin, eps=EPS)

    cost = pl.CostEstimate(
        flops=5 * b_pad * D + 10 * b_pad,
        transcendentals=b_pad,                     # one sqrt per example
        bytes_accessed=2 * b_pad * D * itemsize + b_pad * 4 + num_tiles * 8 * 128 * 4,
    )

    partials = pl.pallas_call(
        kernel,
        out_shape=jax.ShapeDtypeStruct((num_tiles * 8, 128), jnp.float32),
        grid=(num_tiles,),
        in_specs=[
            pl.BlockSpec((tb, D), lambda i: (i, 0)),
            pl.BlockSpec((tb, D), lambda i: (i, 0)),
            pl.BlockSpec((tb, 1), lambda i: (i, 0)),
        ],
        out_specs=pl.BlockSpec((8, 128), lambda i: (i, 0)),
        compiler_params=pltpu.CompilerParams(dimension_semantics=("parallel",)),
        cost_estimate=cost,
    )(output1, output2, label2d)

    # Tiny finalize in the wrapper: sum of per-tile partials, then the batch mean.
    return jnp.sum(partials) / B


def _reference(output1, output2, label):
    diff = output1 - output2 + EPS
    d = jnp.sqrt(jnp.sum(diff * diff, axis=-1))
    clamped = jnp.maximum(MARGIN - d, 0.0)
    return jnp.mean((1.0 - label) * d**2 + label * clamped**2)


if __name__ == "__main__":
    key = jax.random.PRNGKey(0)
    k1, k2, k3 = jax.random.split(key, 3)

    B, D = 8, 32
    output1 = jax.random.normal(k1, (B, D), dtype=jnp.float32)
    output2 = jax.random.normal(k2, (B, D), dtype=jnp.float32)
    label = jax.random.bernoulli(k3, 0.5, (B,)).astype(jnp.float32)

    # f32 path
    loss = jax.block_until_ready(contrastive_loss(output1, output2, label))
    ref = _reference(output1, output2, label)
    assert jnp.allclose(loss, ref, rtol=1e-5, atol=1e-5), (loss, ref)

    # bf16 path: inputs stay bf16 in HBM, cast happens inside the kernel.
    o1b = output1.astype(jnp.bfloat16)
    o2b = output2.astype(jnp.bfloat16)
    loss_bf16 = jax.block_until_ready(contrastive_loss(o1b, o2b, label))
    ref_bf16 = _reference(o1b.astype(jnp.float32), o2b.astype(jnp.float32), label)
    assert jnp.allclose(loss_bf16, ref_bf16, rtol=1e-4, atol=1e-4), (loss_bf16, ref_bf16)

    # Ragged batch path (exercises tile padding + in-kernel row masking).
    B2 = 13
    o1c = jax.random.normal(k1, (B2, D), dtype=jnp.float32)
    o2c = jax.random.normal(k2, (B2, D), dtype=jnp.float32)
    lc = jax.random.bernoulli(k3, 0.5, (B2,)).astype(jnp.float32)
    loss_c = jax.block_until_ready(contrastive_loss(o1c, o2c, lc))
    ref_c = _reference(o1c, o2c, lc)
    assert jnp.allclose(loss_c, ref_c, rtol=1e-5, atol=1e-5), (loss_c, ref_c)

    print("KERNEL_OK")
</pallas_src>

<mosaic_0001>
module attributes {stable_mosaic.version = 11 : i64} {
  func.func @_contrastive_loss_kernel(%arg0: i32, %arg1: memref<8x32xf32, #tpu.memory_space<vmem>>, %arg2: memref<8x32xf32, #tpu.memory_space<vmem>>, %arg3: memref<8x1xf32, #tpu.memory_space<vmem>>, %arg4: memref<8x128xf32, #tpu.memory_space<vmem>>) attributes {dimension_semantics = [#tpu.dimension_semantics<parallel>], iteration_bounds = array<i64: 1>, scalar_prefetch = 0 : i64, scratch_operands = 0 : i64, tpu.core_type = #tpu.core_type<tc>, window_params = [{transform_indices = @transform_0, window_bounds = array<i64: 8, 32>}, {transform_indices = @transform_1, window_bounds = array<i64: 8, 32>}, {transform_indices = @transform_2, window_bounds = array<i64: 8, 1>}, {transform_indices = @transform_3, window_bounds = array<i64: 8, 128>}]} {
    %c0 = arith.constant 0 : index
    %c0_0 = arith.constant 0 : index
    %0 = vector.load %arg1[%c0, %c0_0] : memref<8x32xf32, #tpu.memory_space<vmem>>, vector<8x32xf32>
    %c0_1 = arith.constant 0 : index
    %c0_2 = arith.constant 0 : index
    %1 = vector.load %arg2[%c0_1, %c0_2] : memref<8x32xf32, #tpu.memory_space<vmem>>, vector<8x32xf32>
    %c0_3 = arith.constant 0 : index
    %c0_4 = arith.constant 0 : index
    %2 = vector.load %arg3[%c0_3, %c0_4] : memref<8x1xf32, #tpu.memory_space<vmem>>, vector<8x1xf32>
    %3 = arith.subf %0, %1 : vector<8x32xf32>
    %cst = arith.constant 9.99999997E-7 : f32
    %4 = vector.broadcast %cst : f32 to vector<8x32xf32>
    %5 = arith.addf %3, %4 : vector<8x32xf32>
    %6 = arith.mulf %5, %5 : vector<8x32xf32>
    %cst_5 = arith.constant dense<0.000000e+00> : vector<8xf32>
    %7 = vector.multi_reduction <add>, %6, %cst_5 [1] : vector<8x32xf32> to vector<8xf32>
    %8 = vector.shape_cast %7 : vector<8xf32> to vector<8x1xf32>
    %9 = math.sqrt %8 : vector<8x1xf32>
    %cst_6 = arith.constant 2.500000e+00 : f32
    %10 = vector.broadcast %cst_6 : f32 to vector<8x1xf32>
    %11 = arith.subf %10, %9 : vector<8x1xf32>
    %cst_7 = arith.constant 0.000000e+00 : f32
    %12 = vector.broadcast %cst_7 : f32 to vector<8x1xf32>
    %13 = arith.maximumf %11, %12 : vector<8x1xf32>
    %cst_8 = arith.constant 1.000000e+00 : f32
    %14 = vector.broadcast %cst_8 : f32 to vector<8x1xf32>
    %15 = arith.subf %14, %2 : vector<8x1xf32>
    %16 = arith.mulf %15, %8 : vector<8x1xf32>
    %17 = arith.mulf %13, %13 : vector<8x1xf32>
    %18 = arith.mulf %2, %17 : vector<8x1xf32>
    %19 = arith.addf %16, %18 : vector<8x1xf32>
    %20 = tpu.iota {dimensions = array<i32: 0>} : vector<8x1xi32>
    %c8_i32 = arith.constant 8 : i32
    %21 = arith.muli %arg0, %c8_i32 : i32
    %22 = vector.broadcast %21 : i32 to vector<8x1xi32>
    %23 = arith.addi %22, %20 : vector<8x1xi32>
    %c8_i32_9 = arith.constant 8 : i32
    %24 = vector.broadcast %c8_i32_9 : i32 to vector<8x1xi32>
    %25 = arith.cmpi slt, %23, %24 : vector<8x1xi32>
    %cst_10 = arith.constant 0.000000e+00 : f32
    %26 = vector.broadcast %cst_10 : f32 to vector<8x1xf32>
    %27 = arith.select %25, %19, %26 : vector<8x1xi1>, vector<8x1xf32>
    %28 = vector.shape_cast %27 : vector<8x1xf32> to vector<1x8x1xf32>
    %cst_11 = arith.constant dense<0.000000e+00> : vector<1xf32>
    %29 = vector.multi_reduction <add>, %28, %cst_11 [1, 2] : vector<1x8x1xf32> to vector<1xf32>
    %30 = vector.shape_cast %29 : vector<1xf32> to vector<1x1x1xf32>
    %31 = vector.extract %30[0, 0, 0] : f32 from vector<1x1x1xf32>
    %32 = tpu.iota {dimensions = array<i32: 0>} : vector<8x128xi32>
    %33 = tpu.iota {dimensions = array<i32: 1>} : vector<8x128xi32>
    %c0_i32 = arith.constant 0 : i32
    %34 = vector.broadcast %c0_i32 : i32 to vector<8x128xi32>
    %35 = arith.cmpi eq, %32, %34 : vector<8x128xi32>
    %c0_i32_12 = arith.constant 0 : i32
    %36 = vector.broadcast %c0_i32_12 : i32 to vector<8x128xi32>
    %37 = arith.cmpi eq, %33, %36 : vector<8x128xi32>
    %38 = arith.andi %35, %37 : vector<8x128xi1>
    %cst_13 = arith.constant 0.000000e+00 : f32
    %39 = vector.broadcast %31 : f32 to vector<8x128xf32>
    %40 = vector.broadcast %cst_13 : f32 to vector<8x128xf32>
    %41 = arith.select %38, %39, %40 : vector<8x128xi1>, vector<8x128xf32>
    %c0_14 = arith.constant 0 : index
    %c0_15 = arith.constant 0 : index
    %42 = vector.load %arg4[%c0_14, %c0_15] : memref<8x128xf32, #tpu.memory_space<vmem>>, vector<8x128xf32>
    tpu.vector_store %arg4[%c0_14, %c0_15], %41 {strides = array<i32>} : memref<8x128xf32, #tpu.memory_space<vmem>>, vector<8x128xf32>,
    return
  }
  func.func @transform_0(%arg0: i32) -> (i32, i32) {
    %c0_i32 = arith.constant 0 : i32
    %c0_i32_0 = arith.constant 0 : i32
    return %arg0, %c0_i32 : i32, i32
  }
  func.func @transform_1(%arg0: i32) -> (i32, i32) {
    %c0_i32 = arith.constant 0 : i32
    %c0_i32_0 = arith.constant 0 : i32
    return %arg0, %c0_i32 : i32, i32
  }
  func.func @transform_2(%arg0: i32) -> (i32, i32) {
    %c0_i32 = arith.constant 0 : i32
    %c0_i32_0 = arith.constant 0 : i32
    return %arg0, %c0_i32 : i32, i32
  }
  func.func @transform_3(%arg0: i32) -> (i32, i32) {
    %c0_i32 = arith.constant 0 : i32
    %c0_i32_0 = arith.constant 0 : i32
    return %arg0, %c0_i32 : i32, i32
  }
}

</mosaic_0001>

<llo_original>
// kernel: tpu_custom_call.1
$region0: #{tpu_custom_call.1}
  #allocation0 [shape = 'u32[]', space=smem, size = 0x4, offset = 0x4, fixed_abs, tag = 'smem constant byte address 0x4 - core index']
  #allocation1 [shape = 'u32[144,128]{1,0:T(1,128)}', space=vmem, size = 0x12000, scoped, tag = 'internal scratch']
  %s0 = inlined_call_operand.vmem [shape: f32[8,32], index: 0, kind: input, shape index: {}]
  %s1 = inlined_call_operand.hbm [shape: f32[8,32], index: 1, kind: input, shape index: {}]
  %s2 = inlined_call_operand.vmem [shape: f32[8,1], index: 2, kind: input, shape index: {}]
  %s3 = inlined_call_operand.hbm [shape: f32[8,128], index: 3, kind: output, shape index: {}]
  %s4 = sld [smem:[#allocation0]]
  $region26: #{tpu_custom_call.1} parent=0
    _
  %s6 = ssub.s32 1, %s4
  %s7 = scalar_select 0, %s6, %s4
  $region1: #{tpu_custom_call.1} parent=0
    #allocation2 [shape = 'u8[4096]{0}', space=vmem, size = 0x1000, scoped, tag = 'input window, operand 1, single buffered']
    #allocation3 [shape = 's32[1]{0}', space=sflag, size = 0x4, scoped, tag = 'scoped memory for tpu_custom_call.1']
    #allocation4 [shape = 's32[1]{0}', space=sflag, size = 0x4, scoped, tag = 'scoped memory for tpu_custom_call.1']
    #allocation5 [shape = 'u8[4096]{0}', space=vmem, size = 0x1000, scoped, tag = 'output window, operand 0, single buffered']
    %8 = vsyncpa [#allocation3], 0
    %9 = vsyncpa [#allocation4], 0
    // Predicated region
    $region2: #{tpu_custom_call.1} parent=1 // pred_check
      _
    $region3: #{tpu_custom_call.1} parent=1 // pred_check_branch
      %11 = sbr.rel (0) target = $region5
    $region4: #{tpu_custom_call.1} parent=1 // pred_region
      _
    $region5: #{tpu_custom_call.1} parent=1 // pred_fallthru
      _
    // Predicated region
    $region6: #{tpu_custom_call.1} parent=1 // pred_check
      _
    $region7: #{tpu_custom_call.1} parent=1 // pred_check_branch
      %13 = sbr.rel (0) target = $region9
    $region8: #{tpu_custom_call.1} parent=1 // pred_region
      %s15 = ssub.s32 128, 128
      %16 = vsyncadd [#allocation3], %s15
      %s18 = sshll.u32 [#allocation2], 4
      %s19 = int_to_ptr.vmem [resolvable:$true] %s18
      %21 = dma.hbm_to_vmem [thread:$0]  %s1, 128, %s19, [#allocation3]
    $region9: #{tpu_custom_call.1} parent=1 // pred_fallthru
      _
    // Predicated region
    $region10: #{tpu_custom_call.1} parent=1 // pred_check
      _
    $region11: #{tpu_custom_call.1} parent=1 // pred_check_branch
      %23 = sbr.rel (0) target = $region13
    $region12: #{tpu_custom_call.1} parent=1 // pred_region
      _
    $region13: #{tpu_custom_call.1} parent=1 // pred_fallthru
      _
    // Predicated region
    $region14: #{tpu_custom_call.1} parent=1 // pred_check
      _
    $region15: #{tpu_custom_call.1} parent=1 // pred_check_branch
      %25 = sbr.rel (0) target = $region17
    $region16: #{tpu_custom_call.1} parent=1 // pred_region
      %26 = dma.done [#allocation3], 128
    $region17: #{tpu_custom_call.1} parent=1 // pred_fallthru
      _
    %v27 = vld [vmem:[%s0] sm:$0xff]
    %v28 = vld [vmem:[#allocation2] sm:$0xff]
    %v29 = vld [vmem:[%s2] sm:$0xff]
    %v30 = vsub.f32 %v27, %v28
    %v31 = vadd.f32 %v30, 1e-06
    %v32 = vmul.f32 %v31, %v31
    %vm33 = vcmask 261120
    %v34 = vsel %vm33, %v32, 0.0
    %35 = vadd.xlane.f32.xlu0 %v34
    %v36 = vpop.xlane.xlu0 %35
    %v37 = vrsqrt.pop %v36
    %v38 = vmul.f32 %v36, %v37
    %vm39 = vcmp.eq.f32.partialorder %v36, inf
    %v40 = vsel %vm39, %v36, %v38
    %vm41 = vcmp.eq.f32.partialorder %v36, 0.0
    %v42 = vand.u32 %v36, 2147483648
    %v43 = vsel %vm41, %v42, %v40
    %v44 = vsub.f32 2.5, %v43
    %v45 = vmax.f32 %v44, 0.0
    %v46 = vsub.f32 1.0, %v29
    %v47 = vmul.f32 %v46, %v36
    %v48 = vmul.f32 %v45, %v45
    %v49 = vmul.f32 %v29, %v48
    %v50 = vadd.f32 %v47, %v49
    %v51 = vlaneseq
    %v52 = vshrl.u32 %v51, 7
    %s53 = smul.u32 0, 8
    %v54 = vstv %s53
    %v55 = vadd.s32 %v54, %v52
    %vm56 = vcmp.lt.s32.totalorder %v55, 8
    %v57 = vsel %vm56, %v50, 0.0
    %vm58 = vcmask 7168
    %v59 = vsel %vm58, %v57, 0.0
    %60 = vadd.xlane.f32.xlu0 %v59
    %v61 = vpop.xlane.xlu0 %60
    %v62 = vrot.slane %v61, 4
    %v63 = vadd.f32 %v61, %v62
    %v64 = vrot.slane %v63, 2
    %v65 = vadd.f32 %v63, %v64
    %v66 = vrot.slane %v65, 1
    %v67 = vadd.f32 %v65, %v66
    %s68 = vtos %v67
    %v69 = vlaneseq
    %v70 = vand.u32 %v69, 127
    %vm71 = vcmp.eq.s32.totalorder %v52, 0
    %vm72 = vcmp.eq.s32.totalorder %v70, 0
    %vm73 = vmand %vm71, %vm72
    %v74 = vstv %s68
    %v75 = vsel %vm73, %v74, 0.0
    %76 = vst [vmem:[#allocation5] sm:$0xff] %v75
    // Predicated region
    $region18: #{tpu_custom_call.1} parent=1 // pred_check
      _
    $region19: #{tpu_custom_call.1} parent=1 // pred_check_branch
      %78 = sbr.rel (0) target = $region21
    $region20: #{tpu_custom_call.1} parent=1 // pred_region
      %s80 = ssub.s32 128, 128
      %81 = vsyncadd [#allocation4], %s80
      %s83 = sshll.u32 [#allocation5], 4
      %s84 = int_to_ptr.vmem [resolvable:$true] %s83
      %86 = dma.vmem_to_hbm [thread:$0]  %s84, 128, %s3, [#allocation4]
    $region21: #{tpu_custom_call.1} parent=1 // pred_fallthru
      _
    // Predicated region
    $region22: #{tpu_custom_call.1} parent=1 // pred_check
      _
    $region23: #{tpu_custom_call.1} parent=1 // pred_check_branch
      %88 = sbr.rel (0) target = $region25
    $region24: #{tpu_custom_call.1} parent=1 // pred_region
      %89 = dma.done [#allocation4], 128
    $region25: #{tpu_custom_call.1} parent=1 // pred_fallthru
      _
    %90 = vsyncpa [#allocation3], 1
    %91 = vsyncpa [#allocation4], 1

</llo_original>
